<compile_context>
chip_gen: v7x
topology: tpu7x:2x2x1
jax: 0.10.0
libtpu: 0.0.40
codegen_flags: <defaults>
</compile_context>

<pallas_src>
import jax
import jax.numpy as jnp
from jax.experimental import pallas as pl
from jax.experimental.pallas import tpu as pltpu


def _chomp_copy_kernel(x_ref, o_ref):
    # Blocks are identically shaped and start at time offset 0, so input and
    # output blocks line up exactly.  Lanes past L_out in the last time block
    # (chomped tail / OOB read padding) are masked out by Pallas on the store.
    o_ref[...] = x_ref[...]


def _round_up(x, m):
    return -(-x // m) * m


def _pick_tiles(rows, l_out, itemsize, budget_bytes=1 << 20):
    """~1 MiB byte-budget tile picker: lane-dense time tile first, then rows."""
    sub = max(8, 32 // itemsize)   # sublane packing: 8 f32 / 16 bf16 / 32 int8
    lane = 128
    # Time (lane) tile: as wide as the budget allows at the minimum row count.
    max_t = max(lane, (budget_bytes // (sub * itemsize)) // lane * lane)
    t_tile = min(_round_up(l_out, lane), max_t)
    # Row (sublane) tile: fill the remaining budget.
    max_r = max(sub, (budget_bytes // (t_tile * itemsize)) // sub * sub)
    r_tile = min(_round_up(rows, sub), max_r)
    return r_tile, t_tile


def chomp1d(x, chomp_size):
    """Equivalent of Chomp1d(chomp_size).forward(x) with x: (B, C, L)."""
    B, C, L = x.shape
    # PyTorch's x[:, :, :-0] would be empty; Chomp1d is always used with
    # chomp_size = conv padding >= 1, which is what we support.
    assert chomp_size >= 1, "chomp_size must be >= 1"
    L_out = L - chomp_size
    assert L_out > 0, "chomp_size must be smaller than the time dimension"

    # Fold batch & channels into one sublane axis (free reshape for a
    # contiguous array); removes any "tile must divide C" constraint.
    R = B * C
    x2 = x.reshape(R, L)

    itemsize = jnp.dtype(x.dtype).itemsize
    r_tile, t_tile = _pick_tiles(R, L_out, itemsize)
    grid = (pl.cdiv(R, r_tile), pl.cdiv(L_out, t_tile))

    cost = pl.CostEstimate(
        flops=0,
        transcendentals=0,
        bytes_accessed=2 * R * L_out * itemsize,  # read + write of kept prefix
    )

    out2 = pl.pallas_call(
        _chomp_copy_kernel,
        out_shape=jax.ShapeDtypeStruct((R, L_out), x.dtype),
        grid=grid,
        in_specs=[pl.BlockSpec((r_tile, t_tile), lambda r, t: (r, t))],
        out_specs=pl.BlockSpec((r_tile, t_tile), lambda r, t: (r, t)),
        compiler_params=pltpu.CompilerParams(
            dimension_semantics=("parallel", "parallel")),
        cost_estimate=cost,
    )(x2)
    return out2.reshape(B, C, L_out)


def _chomp1d_ref(x, chomp_size):
    """Pure-JAX reference mirroring the PyTorch semantics."""
    return x[:, :, : x.shape[-1] - chomp_size]


if __name__ == "__main__":
    # Small case (masked last time block: L_out = 13 < 128).
    B, C, L, chomp = 2, 4, 16, 3
    x = jax.random.normal(jax.random.PRNGKey(0), (B, C, L), dtype=jnp.float32)
    out = jax.block_until_ready(chomp1d(x, chomp))
    ref = _chomp1d_ref(x, chomp)
    assert out.shape == ref.shape, (out.shape, ref.shape)
    assert jnp.array_equal(out, ref)

    # Odd channel count + lane-aligned output (row padding masked, time dense).
    B2, C2, L2, chomp2 = 2, 5, 259, 3  # R = 10, L_out = 256
    x2 = jax.random.normal(jax.random.PRNGKey(0), (B2, C2, L2), dtype=jnp.float32)
    out2 = jax.block_until_ready(chomp1d(x2, chomp2))
    ref2 = _chomp1d_ref(x2, chomp2)
    assert out2.shape == ref2.shape, (out2.shape, ref2.shape)
    assert jnp.array_equal(out2, ref2)

    # bf16 case (exercises the dtype-aware 16-row sublane tile).
    B3, C3, L3, chomp3 = 2, 3, 140, 12  # L_out = 128
    x3 = jax.random.normal(jax.random.PRNGKey(0), (B3, C3, L3), dtype=jnp.bfloat16)
    out3 = jax.block_until_ready(chomp1d(x3, chomp3))
    ref3 = _chomp1d_ref(x3, chomp3)
    assert out3.shape == ref3.shape, (out3.shape, ref3.shape)
    assert jnp.array_equal(out3, ref3)

    print("KERNEL_OK")
</pallas_src>

<mosaic_0001>
module attributes {stable_mosaic.version = 11 : i64} {
  func.func @_chomp_copy_kernel(%arg0: i32, %arg1: i32, %arg2: memref<8x128xf32, #tpu.memory_space<vmem>>, %arg3: memref<8x128xf32, #tpu.memory_space<vmem>>) attributes {dimension_semantics = [#tpu.dimension_semantics<parallel>, #tpu.dimension_semantics<parallel>], iteration_bounds = array<i64: 1, 1>, scalar_prefetch = 0 : i64, scratch_operands = 0 : i64, tpu.core_type = #tpu.core_type<tc>, window_params = [{transform_indices = @transform_0, window_bounds = array<i64: 8, 128>}, {transform_indices = @transform_1, window_bounds = array<i64: 8, 128>}]} {
    %c0 = arith.constant 0 : index
    %c0_0 = arith.constant 0 : index
    %0 = vector.load %arg2[%c0, %c0_0] : memref<8x128xf32, #tpu.memory_space<vmem>>, vector<8x128xf32>
    %c0_1 = arith.constant 0 : index
    %c0_2 = arith.constant 0 : index
    %1 = vector.load %arg3[%c0_1, %c0_2] : memref<8x128xf32, #tpu.memory_space<vmem>>, vector<8x128xf32>
    tpu.vector_store %arg3[%c0_1, %c0_2], %0 {strides = array<i32>} : memref<8x128xf32, #tpu.memory_space<vmem>>, vector<8x128xf32>,
    return
  }
  func.func @transform_0(%arg0: i32, %arg1: i32) -> (i32, i32) {
    %c0_i32 = arith.constant 0 : i32
    return %arg0, %arg1 : i32, i32
  }
  func.func @transform_1(%arg0: i32, %arg1: i32) -> (i32, i32) {
    %c0_i32 = arith.constant 0 : i32
    return %arg0, %arg1 : i32, i32
  }
}

</mosaic_0001>

<llo_original>
// kernel: tpu_custom_call.1
$region0: #{tpu_custom_call.1}
  #allocation0 [shape = 'u32[]', space=smem, size = 0x4, offset = 0x4, fixed_abs, tag = 'smem constant byte address 0x4 - core index']
  #allocation1 [shape = 'u32[144,128]{1,0:T(1,128)}', space=vmem, size = 0x12000, scoped, tag = 'internal scratch']
  %s0 = inlined_call_operand.hbm [shape: f32[8,16], index: 0, kind: input, shape index: {}]
  %s1 = inlined_call_operand.hbm [shape: f32[8,13], index: 1, kind: output, shape index: {}]
  %s2 = sld [smem:[#allocation0]]
  $region18: #{tpu_custom_call.1} parent=0
    _
  %s4 = ssub.s32 1, %s2
  %s5 = scalar_select 0, %s4, %s2
  $region1: #{tpu_custom_call.1} parent=0
    #allocation2 [shape = 'u8[4096]{0}', space=vmem, size = 0x1000, scoped, tag = 'input window, operand 0, single buffered']
    #allocation3 [shape = 's32[1]{0}', space=sflag, size = 0x4, scoped, tag = 'scoped memory for tpu_custom_call.1']
    #allocation4 [shape = 's32[1]{0}', space=sflag, size = 0x4, scoped, tag = 'scoped memory for tpu_custom_call.1']
    #allocation5 [shape = 'u8[4096]{0}', space=vmem, size = 0x1000, scoped, tag = 'output window, operand 0, single buffered']
    %6 = vsyncpa [#allocation3], 0
    %7 = vsyncpa [#allocation4], 0
    // Predicated region
    $region2: #{tpu_custom_call.1} parent=1 // pred_check
      _
    $region3: #{tpu_custom_call.1} parent=1 // pred_check_branch
      %9 = sbr.rel (0) target = $region5
    $region4: #{tpu_custom_call.1} parent=1 // pred_region
      %s11 = ssub.s32 128, 128
      %12 = vsyncadd [#allocation3], %s11
      %s14 = sshll.u32 [#allocation2], 4
      %s15 = int_to_ptr.vmem [resolvable:$true] %s14
      %17 = dma.hbm_to_vmem [thread:$0]  %s0, 128, %s15, [#allocation3]
    $region5: #{tpu_custom_call.1} parent=1 // pred_fallthru
      _
    // Predicated region
    $region6: #{tpu_custom_call.1} parent=1 // pred_check
      _
    $region7: #{tpu_custom_call.1} parent=1 // pred_check_branch
      %19 = sbr.rel (0) target = $region9
    $region8: #{tpu_custom_call.1} parent=1 // pred_region
      %20 = dma.done [#allocation3], 128
    $region9: #{tpu_custom_call.1} parent=1 // pred_fallthru
      _
    %v21 = vld [vmem:[#allocation2] sm:$0xff]
    %22 = vst [vmem:[#allocation5] sm:$0xff] %v21
    // Predicated region
    $region10: #{tpu_custom_call.1} parent=1 // pred_check
      _
    $region11: #{tpu_custom_call.1} parent=1 // pred_check_branch
      %24 = sbr.rel (0) target = $region13
    $region12: #{tpu_custom_call.1} parent=1 // pred_region
      %s26 = ssub.s32 128, 128
      %27 = vsyncadd [#allocation4], %s26
      %s29 = sshll.u32 [#allocation5], 4
      %s30 = int_to_ptr.vmem [resolvable:$true] %s29
      %32 = dma.vmem_to_hbm [thread:$0]  %s30, 128, %s1, [#allocation4]
    $region13: #{tpu_custom_call.1} parent=1 // pred_fallthru
      _
    // Predicated region
    $region14: #{tpu_custom_call.1} parent=1 // pred_check
      _
    $region15: #{tpu_custom_call.1} parent=1 // pred_check_branch
      %34 = sbr.rel (0) target = $region17
    $region16: #{tpu_custom_call.1} parent=1 // pred_region
      %35 = dma.done [#allocation4], 128
    $region17: #{tpu_custom_call.1} parent=1 // pred_fallthru
      _
    %36 = vsyncpa [#allocation3], 1
    %37 = vsyncpa [#allocation4], 1

</llo_original>
